<compile_context>
chip_gen: v6e
topology: v6e:2x2x1
jax: 0.10.0
libtpu: 0.0.40
codegen_flags: <defaults>
</compile_context>

<pallas_src>
import math

import jax
import jax.numpy as jnp
from jax.experimental import pallas as pl
from jax.experimental.pallas import tpu as pltpu


# ---------------------------------------------------------------------------
# helpers
# ---------------------------------------------------------------------------
def _round_up(x, m):
    return (x + m - 1) // m * m


# ---------------------------------------------------------------------------
# fully fused PNET forward kernel
# ---------------------------------------------------------------------------
def _make_pnet_kernel(n_layers):
    """Kernel refs layout:
         refs[0]                     : x            (B_p, K0_p)  bf16
         refs[1 + 3*i + 0]           : (W*M)^T      (Ki_p, Ni_p) bf16
         refs[1 + 3*i + 1]           : affine       (8, Ni_p)    f32  (row0=scale, row1=shift')
         refs[1 + 3*i + 2]           : skip_W^T / L (Ni_p, O_p)  bf16
         refs[1 + 3*n_layers]        : sum(skip_b)/L (1, O_p)    f32
         refs[2 + 3*n_layers]        : output       (B_p, O_p)   f32
    """
    def kernel(*refs):
        x_ref = refs[0]
        bsum_ref = refs[1 + 3 * n_layers]
        o_ref = refs[2 + 3 * n_layers]

        h = x_ref[...]                                    # bf16, stays padded
        y = None
        for li in range(n_layers):
            w_ref = refs[1 + 3 * li]                      # main (W*M)^T
            aff_ref = refs[2 + 3 * li]                    # packed scale / shift'
            sw_ref = refs[3 + 3 * li]                     # skip W^T (pre-scaled by 1/L)

            # main linear on MXU, f32 accumulation
            z = jnp.dot(h, w_ref[...], preferred_element_type=jnp.float32)
            aff = aff_ref[...]
            # bias + BatchNorm(eval) folded into a single affine
            z = z * aff[0:1, :] + aff[1:2, :]
            # ReLU; dropout is inference-mode identity
            h = jnp.maximum(z, 0.0).astype(jnp.bfloat16)
            # skip linear, accumulated into y in-kernel
            s = jnp.dot(h, sw_ref[...], preferred_element_type=jnp.float32)
            y = s if y is None else y + s

        o_ref[...] = y + bsum_ref[...]
    return kernel


def pnet_forward(x, prep):
    """x: (B, input_dim) f32.  prep: output of prepare_pnet()."""
    layers = prep["layers"]
    n_layers = len(layers)
    B, K = x.shape
    K_p = layers[0]["w_t"].shape[0]
    O_p = prep["bias_sum"].shape[1]
    B_p = _round_up(B, 16)                                # bf16 sublane packing

    # Only the (tiny) activation is padded/cast per call; all weight-side work
    # (mask multiply, transpose, pad, bias/BN fold, 1/L fold, bf16 cast) was
    # done once at prep time.
    x_p = jnp.pad(x.astype(jnp.float32),
                  ((0, B_p - B), (0, K_p - K))).astype(jnp.bfloat16)

    inputs = [x_p]
    in_specs = [pl.BlockSpec(x_p.shape, lambda i: (0, 0))]
    for lyr in layers:
        for name in ("w_t", "aff", "skip_w_t"):
            arr = lyr[name]
            inputs.append(arr)
            in_specs.append(pl.BlockSpec(arr.shape, lambda i: (0, 0)))
    inputs.append(prep["bias_sum"])
    in_specs.append(pl.BlockSpec(prep["bias_sum"].shape, lambda i: (0, 0)))

    out = pl.pallas_call(
        _make_pnet_kernel(n_layers),
        out_shape=jax.ShapeDtypeStruct((B_p, O_p), jnp.float32),
        grid_spec=pltpu.PrefetchScalarGridSpec(
            num_scalar_prefetch=0,
            grid=(1,),
            in_specs=in_specs,
            out_specs=pl.BlockSpec((B_p, O_p), lambda i: (0, 0)),
        ),
        compiler_params=pltpu.CompilerParams(
            dimension_semantics=("arbitrary",),
            vmem_limit_bytes=32 * 1024 * 1024,
        ),
    )(*inputs)

    return out[:B, :prep["output_dim"]]


# ---------------------------------------------------------------------------
# parameter preparation (all weight-side work hoisted out of the forward pass)
# ---------------------------------------------------------------------------
def prepare_pnet(raw_layers, output_dim):
    """raw_layers[i]: dict with f32 arrays
         wm    (out, in)        masked weight (W * M), or plain W for layer 0
         b     (out,)           main bias
         scale (out,)           BatchNorm(eval) scale  = gamma / sqrt(var + eps)
         shift (out,)           BatchNorm(eval) shift  = beta - mean * scale
         sw    (output_dim, out) skip weight
         sb    (output_dim,)    skip bias
    Returns padded bf16/f32 params ready for the fused kernel."""
    L = len(raw_layers)
    O_p = _round_up(output_dim, 128)
    layers = []
    bias_sum = jnp.zeros((output_dim,), jnp.float32)

    for r in raw_layers:
        out_f, in_f = r["wm"].shape
        K_p = _round_up(in_f, 128)
        N_p = _round_up(out_f, 128)

        # pre-masked, pre-transposed, padded, bf16 main weight
        w_t = jnp.pad(jnp.transpose(r["wm"]).astype(jnp.float32),
                      ((0, K_p - in_f), (0, N_p - out_f))).astype(jnp.bfloat16)

        # fold main bias into the BatchNorm shift: shift' = b*scale + shift
        shift_folded = r["b"] * r["scale"] + r["shift"]
        aff = jnp.zeros((8, N_p), jnp.float32)
        aff = aff.at[0, :out_f].set(r["scale"].astype(jnp.float32))
        aff = aff.at[1, :out_f].set(shift_folded.astype(jnp.float32))

        # fold final 1/len(layers) into the skip weight / bias
        sw_t = jnp.pad((jnp.transpose(r["sw"]) / float(L)).astype(jnp.float32),
                       ((0, N_p - out_f), (0, O_p - output_dim))).astype(jnp.bfloat16)
        bias_sum = bias_sum + r["sb"].astype(jnp.float32) / float(L)

        layers.append({"w_t": w_t, "aff": aff, "skip_w_t": sw_t,
                       "n_in": in_f, "n_out": out_f})

    bias_sum_p = jnp.pad(bias_sum, (0, O_p - output_dim)).reshape(1, O_p)
    return {"layers": layers, "bias_sum": bias_sum_p, "output_dim": output_dim}


def _linear_init(key, in_f, out_f):
    kw, kb = jax.random.split(key)
    bound = 1.0 / math.sqrt(in_f)        # kaiming_uniform_(a=sqrt(5)) => 1/sqrt(fan_in)
    w = jax.random.uniform(kw, (out_f, in_f), minval=-bound, maxval=bound,
                           dtype=jnp.float32)
    b = jax.random.uniform(kb, (out_f,), minval=-bound, maxval=bound,
                           dtype=jnp.float32)
    return w, b


def _masked_linear_init(key, in_f, out_f):
    km, kw, kb = jax.random.split(key, 3)
    mask = (jax.random.uniform(km, (out_f, in_f)) > 0.5).astype(jnp.float32)
    bound = 1.0 / math.sqrt(in_f)
    w = jax.random.uniform(kw, (out_f, in_f), minval=-bound, maxval=bound,
                           dtype=jnp.float32)
    b = jax.random.uniform(kb, (out_f,), minval=-bound, maxval=bound,
                           dtype=jnp.float32)
    # MaskedLinear.mask_weights_init(): weight <- mask * (sum(W*M)/sum(M))
    scaling = (w * mask).sum() / mask.sum()
    w = mask * scaling
    return w, mask, b


def init_pnet_raw(key, input_dim, layer_dims, output_dim):
    """Synthetic PNET: layer 0 plain Linear, later layers MaskedLinear, each
    followed by BatchNorm1d(eval), ReLU, dropout(eval) and a skip Linear."""
    eps = 1e-5
    raw = []
    in_f = input_dim
    keys = jax.random.split(key, len(layer_dims))
    for i, out_f in enumerate(layer_dims):
        k_layer, k_skip, k_bn = jax.random.split(keys[i], 3)
        if i == 0:
            w, b = _linear_init(k_layer, in_f, out_f)
            wm = w
        else:
            w, mask, b = _masked_linear_init(k_layer, in_f, out_f)
            wm = w * mask                                  # precompute W*M once

        kg, kb2, km2, kv = jax.random.split(k_bn, 4)
        gamma = jax.random.uniform(kg, (out_f,), minval=0.5, maxval=1.5)
        beta = 0.1 * jax.random.normal(kb2, (out_f,))
        r_mean = 0.1 * jax.random.normal(km2, (out_f,))
        r_var = jax.random.uniform(kv, (out_f,), minval=0.5, maxval=1.5)
        scale = gamma / jnp.sqrt(r_var + eps)
        shift = beta - r_mean * scale

        sw, sb = _linear_init(k_skip, out_f, output_dim)
        raw.append({"wm": wm, "b": b, "scale": scale, "shift": shift,
                    "sw": sw, "sb": sb})
        in_f = out_f
    return raw


# ---------------------------------------------------------------------------
# plain-JAX reference mirroring the kernel arithmetic (bf16 operands, f32 acc)
# ---------------------------------------------------------------------------
def pnet_reference(x, prep):
    out_dim = prep["output_dim"]
    h = x.astype(jnp.bfloat16).astype(jnp.float32)
    y = prep["bias_sum"][0, :out_dim]
    for lyr in prep["layers"]:
        n_in, n_out = lyr["n_in"], lyr["n_out"]
        w = lyr["w_t"].astype(jnp.float32)[:n_in, :n_out]
        z = h @ w
        z = z * lyr["aff"][0, :n_out] + lyr["aff"][1, :n_out]
        h = jnp.maximum(z, 0.0).astype(jnp.bfloat16).astype(jnp.float32)
        sw = lyr["skip_w_t"].astype(jnp.float32)[:n_out, :out_dim]
        y = y + h @ sw
    return y


# ---------------------------------------------------------------------------
if __name__ == "__main__":
    # TODO(synk): dropout / BatchNorm use eval (inference) semantics only;
    # training-mode dropout and running-stat updates are not implemented.
    key = jax.random.PRNGKey(0)
    k_params, k_x = jax.random.split(key)

    batch = 8
    input_dim = 32
    layer_dims = [64, 48, 40]       # genes, pathway level 0, pathway level 1
    output_dim = 16

    raw = init_pnet_raw(k_params, input_dim, layer_dims, output_dim)
    prep = prepare_pnet(raw, output_dim)
    x = jax.random.normal(k_x, (batch, input_dim), dtype=jnp.float32)

    # Params are closed over so layer sizes stay static under jit.
    fwd = jax.jit(lambda xx: pnet_forward(xx, prep))
    out = jax.block_until_ready(fwd(x))

    ref = pnet_reference(x, prep)

    assert out.shape == (batch, output_dim), out.shape
    assert jnp.allclose(out, ref, atol=1e-2, rtol=1e-2), (
        "mismatch vs reference: max abs diff = %e"
        % float(jnp.max(jnp.abs(out - ref))))

    print("KERNEL_OK")
</pallas_src>

<mosaic_0001>
module attributes {stable_mosaic.version = 11 : i64} {
  func.func @kernel(%arg0: i32, %arg1: memref<16x128xbf16, #tpu.memory_space<vmem>>, %arg2: memref<128x128xbf16, #tpu.memory_space<vmem>>, %arg3: memref<8x128xf32, #tpu.memory_space<vmem>>, %arg4: memref<128x128xbf16, #tpu.memory_space<vmem>>, %arg5: memref<128x128xbf16, #tpu.memory_space<vmem>>, %arg6: memref<8x128xf32, #tpu.memory_space<vmem>>, %arg7: memref<128x128xbf16, #tpu.memory_space<vmem>>, %arg8: memref<128x128xbf16, #tpu.memory_space<vmem>>, %arg9: memref<8x128xf32, #tpu.memory_space<vmem>>, %arg10: memref<128x128xbf16, #tpu.memory_space<vmem>>, %arg11: memref<1x128xf32, #tpu.memory_space<vmem>>, %arg12: memref<16x128xf32, #tpu.memory_space<vmem>>) attributes {dimension_semantics = [#tpu.dimension_semantics<arbitrary>], iteration_bounds = array<i64: 1>, scalar_prefetch = 0 : i64, scratch_operands = 0 : i64, tpu.core_type = #tpu.core_type<tc>, window_params = [{pipeline_mode = #tpu.pipeline_mode<synchronous>, transform_indices = @transform_0, window_bounds = array<i64: 16, 128>}, {pipeline_mode = #tpu.pipeline_mode<synchronous>, transform_indices = @transform_1, window_bounds = array<i64: 128, 128>}, {pipeline_mode = #tpu.pipeline_mode<synchronous>, transform_indices = @transform_2, window_bounds = array<i64: 8, 128>}, {pipeline_mode = #tpu.pipeline_mode<synchronous>, transform_indices = @transform_3, window_bounds = array<i64: 128, 128>}, {pipeline_mode = #tpu.pipeline_mode<synchronous>, transform_indices = @transform_4, window_bounds = array<i64: 128, 128>}, {pipeline_mode = #tpu.pipeline_mode<synchronous>, transform_indices = @transform_5, window_bounds = array<i64: 8, 128>}, {pipeline_mode = #tpu.pipeline_mode<synchronous>, transform_indices = @transform_6, window_bounds = array<i64: 128, 128>}, {pipeline_mode = #tpu.pipeline_mode<synchronous>, transform_indices = @transform_7, window_bounds = array<i64: 128, 128>}, {pipeline_mode = #tpu.pipeline_mode<synchronous>, transform_indices = @transform_8, window_bounds = array<i64: 8, 128>}, {pipeline_mode = #tpu.pipeline_mode<synchronous>, transform_indices = @transform_9, window_bounds = array<i64: 128, 128>}, {pipeline_mode = #tpu.pipeline_mode<synchronous>, transform_indices = @transform_10, window_bounds = array<i64: 1, 128>}, {pipeline_mode = #tpu.pipeline_mode<synchronous>, transform_indices = @transform_11, window_bounds = array<i64: 16, 128>}]} {
    %c0 = arith.constant 0 : index
    %c0_0 = arith.constant 0 : index
    %0 = vector.load %arg1[%c0, %c0_0] : memref<16x128xbf16, #tpu.memory_space<vmem>>, vector<16x128xbf16>
    %c0_1 = arith.constant 0 : index
    %c0_2 = arith.constant 0 : index
    %1 = vector.load %arg2[%c0_1, %c0_2] : memref<128x128xbf16, #tpu.memory_space<vmem>>, vector<128x128xbf16>
    %cst = arith.constant dense<0.000000e+00> : vector<16x128xf32>
    %2 = tpu.matmul %0, %1, %cst {dimension_numbers = #tpu.dot_dimension_numbers<[1], [0], [0], [1], [0, 0, 1, 1], [], []>} : vector<16x128xbf16>, vector<128x128xbf16>, vector<16x128xf32> -> vector<16x128xf32>
    %c0_3 = arith.constant 0 : index
    %c0_4 = arith.constant 0 : index
    %3 = vector.load %arg3[%c0_3, %c0_4] : memref<8x128xf32, #tpu.memory_space<vmem>>, vector<8x128xf32>
    %4 = vector.extract_strided_slice %3 {offsets = [0, 0], sizes = [1, 128], strides = [1, 1]} : vector<8x128xf32> to vector<1x128xf32>
    %5 = vector.broadcast %4 : vector<1x128xf32> to vector<16x128xf32>
    %6 = arith.mulf %2, %5 : vector<16x128xf32>
    %7 = vector.extract_strided_slice %3 {offsets = [1, 0], sizes = [1, 128], strides = [1, 1]} : vector<8x128xf32> to vector<1x128xf32>
    %8 = vector.broadcast %7 : vector<1x128xf32> to vector<16x128xf32>
    %9 = arith.addf %6, %8 : vector<16x128xf32>
    %cst_5 = arith.constant 0.000000e+00 : f32
    %10 = vector.broadcast %cst_5 : f32 to vector<16x128xf32>
    %11 = arith.maximumf %9, %10 : vector<16x128xf32>
    %12 = arith.truncf %11 : vector<16x128xf32> to vector<16x128xbf16>
    %c0_6 = arith.constant 0 : index
    %c0_7 = arith.constant 0 : index
    %13 = vector.load %arg4[%c0_6, %c0_7] : memref<128x128xbf16, #tpu.memory_space<vmem>>, vector<128x128xbf16>
    %cst_8 = arith.constant dense<0.000000e+00> : vector<16x128xf32>
    %14 = tpu.matmul %12, %13, %cst_8 {dimension_numbers = #tpu.dot_dimension_numbers<[1], [0], [0], [1], [0, 0, 1, 1], [], []>} : vector<16x128xbf16>, vector<128x128xbf16>, vector<16x128xf32> -> vector<16x128xf32>
    %c0_9 = arith.constant 0 : index
    %c0_10 = arith.constant 0 : index
    %15 = vector.load %arg5[%c0_9, %c0_10] : memref<128x128xbf16, #tpu.memory_space<vmem>>, vector<128x128xbf16>
    %cst_11 = arith.constant dense<0.000000e+00> : vector<16x128xf32>
    %16 = tpu.matmul %12, %15, %cst_11 {dimension_numbers = #tpu.dot_dimension_numbers<[1], [0], [0], [1], [0, 0, 1, 1], [], []>} : vector<16x128xbf16>, vector<128x128xbf16>, vector<16x128xf32> -> vector<16x128xf32>
    %c0_12 = arith.constant 0 : index
    %c0_13 = arith.constant 0 : index
    %17 = vector.load %arg6[%c0_12, %c0_13] : memref<8x128xf32, #tpu.memory_space<vmem>>, vector<8x128xf32>
    %18 = vector.extract_strided_slice %17 {offsets = [0, 0], sizes = [1, 128], strides = [1, 1]} : vector<8x128xf32> to vector<1x128xf32>
    %19 = vector.broadcast %18 : vector<1x128xf32> to vector<16x128xf32>
    %20 = arith.mulf %16, %19 : vector<16x128xf32>
    %21 = vector.extract_strided_slice %17 {offsets = [1, 0], sizes = [1, 128], strides = [1, 1]} : vector<8x128xf32> to vector<1x128xf32>
    %22 = vector.broadcast %21 : vector<1x128xf32> to vector<16x128xf32>
    %23 = arith.addf %20, %22 : vector<16x128xf32>
    %cst_14 = arith.constant 0.000000e+00 : f32
    %24 = vector.broadcast %cst_14 : f32 to vector<16x128xf32>
    %25 = arith.maximumf %23, %24 : vector<16x128xf32>
    %26 = arith.truncf %25 : vector<16x128xf32> to vector<16x128xbf16>
    %c0_15 = arith.constant 0 : index
    %c0_16 = arith.constant 0 : index
    %27 = vector.load %arg7[%c0_15, %c0_16] : memref<128x128xbf16, #tpu.memory_space<vmem>>, vector<128x128xbf16>
    %cst_17 = arith.constant dense<0.000000e+00> : vector<16x128xf32>
    %28 = tpu.matmul %26, %27, %cst_17 {dimension_numbers = #tpu.dot_dimension_numbers<[1], [0], [0], [1], [0, 0, 1, 1], [], []>} : vector<16x128xbf16>, vector<128x128xbf16>, vector<16x128xf32> -> vector<16x128xf32>
    %29 = arith.addf %14, %28 : vector<16x128xf32>
    %c0_18 = arith.constant 0 : index
    %c0_19 = arith.constant 0 : index
    %30 = vector.load %arg8[%c0_18, %c0_19] : memref<128x128xbf16, #tpu.memory_space<vmem>>, vector<128x128xbf16>
    %cst_20 = arith.constant dense<0.000000e+00> : vector<16x128xf32>
    %31 = tpu.matmul %26, %30, %cst_20 {dimension_numbers = #tpu.dot_dimension_numbers<[1], [0], [0], [1], [0, 0, 1, 1], [], []>} : vector<16x128xbf16>, vector<128x128xbf16>, vector<16x128xf32> -> vector<16x128xf32>
    %c0_21 = arith.constant 0 : index
    %c0_22 = arith.constant 0 : index
    %32 = vector.load %arg9[%c0_21, %c0_22] : memref<8x128xf32, #tpu.memory_space<vmem>>, vector<8x128xf32>
    %33 = vector.extract_strided_slice %32 {offsets = [0, 0], sizes = [1, 128], strides = [1, 1]} : vector<8x128xf32> to vector<1x128xf32>
    %34 = vector.broadcast %33 : vector<1x128xf32> to vector<16x128xf32>
    %35 = arith.mulf %31, %34 : vector<16x128xf32>
    %36 = vector.extract_strided_slice %32 {offsets = [1, 0], sizes = [1, 128], strides = [1, 1]} : vector<8x128xf32> to vector<1x128xf32>
    %37 = vector.broadcast %36 : vector<1x128xf32> to vector<16x128xf32>
    %38 = arith.addf %35, %37 : vector<16x128xf32>
    %cst_23 = arith.constant 0.000000e+00 : f32
    %39 = vector.broadcast %cst_23 : f32 to vector<16x128xf32>
    %40 = arith.maximumf %38, %39 : vector<16x128xf32>
    %41 = arith.truncf %40 : vector<16x128xf32> to vector<16x128xbf16>
    %c0_24 = arith.constant 0 : index
    %c0_25 = arith.constant 0 : index
    %42 = vector.load %arg10[%c0_24, %c0_25] : memref<128x128xbf16, #tpu.memory_space<vmem>>, vector<128x128xbf16>
    %cst_26 = arith.constant dense<0.000000e+00> : vector<16x128xf32>
    %43 = tpu.matmul %41, %42, %cst_26 {dimension_numbers = #tpu.dot_dimension_numbers<[1], [0], [0], [1], [0, 0, 1, 1], [], []>} : vector<16x128xbf16>, vector<128x128xbf16>, vector<16x128xf32> -> vector<16x128xf32>
    %44 = arith.addf %29, %43 : vector<16x128xf32>
    %c0_27 = arith.constant 0 : index
    %c0_28 = arith.constant 0 : index
    %45 = vector.load %arg11[%c0_27, %c0_28] : memref<1x128xf32, #tpu.memory_space<vmem>>, vector<1x128xf32>
    %46 = vector.broadcast %45 : vector<1x128xf32> to vector<16x128xf32>
    %47 = arith.addf %44, %46 : vector<16x128xf32>
    %c0_29 = arith.constant 0 : index
    %c0_30 = arith.constant 0 : index
    %48 = vector.load %arg12[%c0_29, %c0_30] : memref<16x128xf32, #tpu.memory_space<vmem>>, vector<16x128xf32>
    tpu.vector_store %arg12[%c0_29, %c0_30], %47 {strides = array<i32>} : memref<16x128xf32, #tpu.memory_space<vmem>>, vector<16x128xf32>,
    return
  }
  func.func @transform_0(%arg0: i32) -> (i32, i32) {
    %c0_i32 = arith.constant 0 : i32
    %c0_i32_0 = arith.constant 0 : i32
    %c0_i32_1 = arith.constant 0 : i32
    return %c0_i32, %c0_i32_0 : i32, i32
  }
  func.func @transform_1(%arg0: i32) -> (i32, i32) {
    %c0_i32 = arith.constant 0 : i32
    %c0_i32_0 = arith.constant 0 : i32
    %c0_i32_1 = arith.constant 0 : i32
    return %c0_i32, %c0_i32_0 : i32, i32
  }
  func.func @transform_2(%arg0: i32) -> (i32, i32) {
    %c0_i32 = arith.constant 0 : i32
    %c0_i32_0 = arith.constant 0 : i32
    %c0_i32_1 = arith.constant 0 : i32
    return %c0_i32, %c0_i32_0 : i32, i32
  }
  func.func @transform_3(%arg0: i32) -> (i32, i32) {
    %c0_i32 = arith.constant 0 : i32
    %c0_i32_0 = arith.constant 0 : i32
    %c0_i32_1 = arith.constant 0 : i32
    return %c0_i32, %c0_i32_0 : i32, i32
  }
  func.func @transform_4(%arg0: i32) -> (i32, i32) {
    %c0_i32 = arith.constant 0 : i32
    %c0_i32_0 = arith.constant 0 : i32
    %c0_i32_1 = arith.constant 0 : i32
    return %c0_i32, %c0_i32_0 : i32, i32
  }
  func.func @transform_5(%arg0: i32) -> (i32, i32) {
    %c0_i32 = arith.constant 0 : i32
    %c0_i32_0 = arith.constant 0 : i32
    %c0_i32_1 = arith.constant 0 : i32
    return %c0_i32, %c0_i32_0 : i32, i32
  }
  func.func @transform_6(%arg0: i32) -> (i32, i32) {
    %c0_i32 = arith.constant 0 : i32
    %c0_i32_0 = arith.constant 0 : i32
    %c0_i32_1 = arith.constant 0 : i32
    return %c0_i32, %c0_i32_0 : i32, i32
  }
  func.func @transform_7(%arg0: i32) -> (i32, i32) {
    %c0_i32 = arith.constant 0 : i32
    %c0_i32_0 = arith.constant 0 : i32
    %c0_i32_1 = arith.constant 0 : i32
    return %c0_i32, %c0_i32_0 : i32, i32
  }
  func.func @transform_8(%arg0: i32) -> (i32, i32) {
    %c0_i32 = arith.constant 0 : i32
    %c0_i32_0 = arith.constant 0 : i32
    %c0_i32_1 = arith.constant 0 : i32
    return %c0_i32, %c0_i32_0 : i32, i32
  }
  func.func @transform_9(%arg0: i32) -> (i32, i32) {
    %c0_i32 = arith.constant 0 : i32
    %c0_i32_0 = arith.constant 0 : i32
    %c0_i32_1 = arith.constant 0 : i32
    return %c0_i32, %c0_i32_0 : i32, i32
  }
  func.func @transform_10(%arg0: i32) -> (i32, i32) {
    %c0_i32 = arith.constant 0 : i32
    %c0_i32_0 = arith.constant 0 : i32
    %c0_i32_1 = arith.constant 0 : i32
    return %c0_i32, %c0_i32_0 : i32, i32
  }
  func.func @transform_11(%arg0: i32) -> (i32, i32) {
    %c0_i32 = arith.constant 0 : i32
    %c0_i32_0 = arith.constant 0 : i32
    %c0_i32_1 = arith.constant 0 : i32
    return %c0_i32, %c0_i32_0 : i32, i32
  }
}

</mosaic_0001>

<llo_original>
// kernel: _lambda_.1
$region0: #{_lambda_.1}
  #allocation0 [shape = 'u32[]', space=smem, size = 0x4, offset = 0x4, fixed_abs, tag = 'smem constant byte address 0x4 - core index']
  #allocation1 [shape = 'u32[144,128]{1,0:T(1,128)}', space=vmem, size = 0x12000, scoped, tag = 'internal scratch']
  %s0 = inlined_call_operand.vmem [shape: bf16[16,128], index: 0, kind: input, shape index: {}]
  %s1 = inlined_call_operand.hbm [shape: bf16[128,128], index: 1, kind: input, shape index: {}]
  %s2 = inlined_call_operand.vmem [shape: f32[8,128], index: 2, kind: input, shape index: {}]
  %s3 = inlined_call_operand.hbm [shape: bf16[128,128], index: 3, kind: input, shape index: {}]
  %s4 = inlined_call_operand.hbm [shape: bf16[128,128], index: 4, kind: input, shape index: {}]
  %s5 = inlined_call_operand.vmem [shape: f32[8,128], index: 5, kind: input, shape index: {}]
  %s6 = inlined_call_operand.hbm [shape: bf16[128,128], index: 6, kind: input, shape index: {}]
  %s7 = inlined_call_operand.hbm [shape: bf16[128,128], index: 7, kind: input, shape index: {}]
  %s8 = inlined_call_operand.vmem [shape: f32[8,128], index: 8, kind: input, shape index: {}]
  %s9 = inlined_call_operand.hbm [shape: bf16[128,128], index: 9, kind: input, shape index: {}]
  %s10 = inlined_call_operand.vmem [shape: f32[1,128], index: 10, kind: input, shape index: {}]
  %s11 = inlined_call_operand.vmem [shape: f32[16,128], index: 11, kind: output, shape index: {}]
  %s12 = sld [smem:[#allocation0]]
  $region78: #{_lambda_.1} parent=0
    _
  %s14 = ssub.s32 1, %s12
  %s15 = scalar_select 0, %s14, %s12
  $region1: #{_lambda_.1} parent=0
    #allocation2 [shape = 'u8[32768]{0}', space=vmem, size = 0x8000, scoped, tag = 'input window, operand 1, single buffered']
    #allocation3 [shape = 's32[1]{0}', space=sflag, size = 0x4, scoped, tag = 'scoped memory for _lambda_.1']
    #allocation4 [shape = 'u8[32768]{0}', space=vmem, size = 0x8000, scoped, tag = 'input window, operand 3, single buffered']
    #allocation5 [shape = 's32[1]{0}', space=sflag, size = 0x4, scoped, tag = 'scoped memory for _lambda_.1']
    #allocation6 [shape = 'u8[32768]{0}', space=vmem, size = 0x8000, scoped, tag = 'input window, operand 4, single buffered']
    #allocation7 [shape = 'u8[32768]{0}', space=vmem, size = 0x8000, scoped, tag = 'input window, operand 6, single buffered']
    #allocation8 [shape = 's32[1]{0}', space=sflag, size = 0x4, scoped, tag = 'scoped memory for _lambda_.1']
    #allocation9 [shape = 'u8[32768]{0}', space=vmem, size = 0x8000, scoped, tag = 'input window, operand 7, single buffered']
    #allocation10 [shape = 'u8[32768]{0}', space=vmem, size = 0x8000, scoped, tag = 'input window, operand 9, single buffered']
    #allocation11 [shape = 's32[1]{0}', space=sflag, size = 0x4, scoped, tag = 'scoped memory for _lambda_.1']
    %16 = vsyncpa [#allocation3], 0
    %17 = vsyncpa [#allocation5], 0
    %18 = vsyncpa [#allocation8], 0
    %19 = vsyncpa [#allocation11], 0
    // Predicated region
    $region2: #{_lambda_.1} parent=1 // pred_check
      _
    $region3: #{_lambda_.1} parent=1 // pred_check_branch
      %21 = sbr.rel (0) target = $region5
    $region4: #{_lambda_.1} parent=1 // pred_region
      _
    $region5: #{_lambda_.1} parent=1 // pred_fallthru
      _
    // Predicated region
    $region6: #{_lambda_.1} parent=1 // pred_check
      _
    $region7: #{_lambda_.1} parent=1 // pred_check_branch
      %23 = sbr.rel (0) target = $region9
    $region8: #{_lambda_.1} parent=1 // pred_region
      %s25 = ssub.s32 1024, 1024
      %26 = vsyncadd [#allocation3], %s25
      %s27 = sshll.u32 [#allocation2], 4
      %s28 = int_to_ptr.vmem [resolvable:$true] %s27
      %33 = dma.hbm_to_vmem [thread:$0]  %s1, 1024, %s28, [#allocation3], 64, 64, 4
    $region9: #{_lambda_.1} parent=1 // pred_fallthru
      _
    // Predicated region
    $region10: #{_lambda_.1} parent=1 // pred_check
      _
    $region11: #{_lambda_.1} parent=1 // pred_check_branch
      %35 = sbr.rel (0) target = $region13
    $region12: #{_lambda_.1} parent=1 // pred_region
      _
    $region13: #{_lambda_.1} parent=1 // pred_fallthru
      _
    // Predicated region
    $region14: #{_lambda_.1} parent=1 // pred_check
      _
    $region15: #{_lambda_.1} parent=1 // pred_check_branch
      %37 = sbr.rel (0) target = $region17
    $region16: #{_lambda_.1} parent=1 // pred_region
      %s39 = ssub.s32 1024, 1024
      %40 = vsyncadd [#allocation5], %s39
      %s41 = sshll.u32 [#allocation4], 4
      %s42 = int_to_ptr.vmem [resolvable:$true] %s41
      %47 = dma.hbm_to_vmem [thread:$0]  %s3, 1024, %s42, [#allocation5], 64, 64, 4
    $region17: #{_lambda_.1} parent=1 // pred_fallthru
      _
    // Predicated region
    $region18: #{_lambda_.1} parent=1 // pred_check
      _
    $region19: #{_lambda_.1} parent=1 // pred_check_branch
      %49 = sbr.rel (0) target = $region21
    $region20: #{_lambda_.1} parent=1 // pred_region
      %s51 = ssub.s32 1024, 1024
      %52 = vsyncadd [#allocation5], %s51
      %s53 = sshll.u32 [#allocation6], 4
      %s54 = int_to_ptr.vmem [resolvable:$true] %s53
      %59 = dma.hbm_to_vmem [thread:$0]  %s4, 1024, %s54, [#allocation5], 64, 64, 4
    $region21: #{_lambda_.1} parent=1 // pred_fallthru
      _
    // Predicated region
    $region22: #{_lambda_.1} parent=1 // pred_check
      _
    $region23: #{_lambda_.1} parent=1 // pred_check_branch
      %61 = sbr.rel (0) target = $region25
    $region24: #{_lambda_.1} parent=1 // pred_region
      _
    $region25: #{_lambda_.1} parent=1 // pred_fallthru
      _
    // Predicated region
    $region26: #{_lambda_.1} parent=1 // pred_check
      _
    $region27: #{_lambda_.1} parent=1 // pred_check_branch
      %63 = sbr.rel (0) target = $region29
    $region28: #{_lambda_.1} parent=1 // pred_region
      %s65 = ssub.s32 1024, 1024
      %66 = vsyncadd [#allocation8], %s65
      %s67 = sshll.u32 [#allocation7], 4
      %s68 = int_to_ptr.vmem [resolvable:$true] %s67
      %73 = dma.hbm_to_vmem [thread:$0]  %s6, 1024, %s68, [#allocation8], 64, 64, 4
    $region29: #{_lambda_.1} parent=1 // pred_fallthru
      _
    // Predicated region
    $region30: #{_lambda_.1} parent=1 // pred_check
      _
    $region31: #{_lambda_.1} parent=1 // pred_check_branch
      %75 = sbr.rel (0) target = $region33
    $region32: #{_lambda_.1} parent=1 // pred_region
      %s77 = ssub.s32 1024, 1024
      %78 = vsyncadd [#allocation8], %s77
      %s79 = sshll.u32 [#allocation9], 4
      %s80 = int_to_ptr.vmem [resolvable:$true] %s79
      %85 = dma.hbm_to_vmem [thread:$0]  %s7, 1024, %s80, [#allocation8], 64, 64, 4
    $region33: #{_lambda_.1} parent=1 // pred_fallthru
      _
    // Predicated region
    $region34: #{_lambda_.1} parent=1 // pred_check
      _
    $region35: #{_lambda_.1} parent=1 // pred_check_branch
      %87 = sbr.rel (0) target = $region37
    $region36: #{_lambda_.1} parent=1 // pred_region
      _
    $region37: #{_lambda_.1} parent=1 // pred_fallthru
      _
    // Predicated region
    $region38: #{_lambda_.1} parent=1 // pred_check
      _
    $region39: #{_lambda_.1} parent=1 // pred_check_branch
      %89 = sbr.rel (0) target = $region41
    $region40: #{_lambda_.1} parent=1 // pred_region
      %s91 = ssub.s32 1024, 1024
      %92 = vsyncadd [#allocation11], %s91
      %s93 = sshll.u32 [#allocation10], 4
      %s94 = int_to_ptr.vmem [resolvable:$true] %s93
      %99 = dma.hbm_to_vmem [thread:$0]  %s9, 1024, %s94, [#allocation11], 64, 64, 4
    $region41: #{_lambda_.1} parent=1 // pred_fallthru
      _
    // Predicated region
    $region42: #{_lambda_.1} parent=1 // pred_check
      _
    $region43: #{_lambda_.1} parent=1 // pred_check_branch
      %101 = sbr.rel (0) target = $region45
    $region44: #{_lambda_.1} parent=1 // pred_region
      _
    $region45: #{_lambda_.1} parent=1 // pred_fallthru
      _
    // Predicated region
    $region46: #{_lambda_.1} parent=1 // pred_check
      _
    $region47: #{_lambda_.1} parent=1 // pred_check_branch
      %103 = sbr.rel (0) target = $region49
    $region48: #{_lambda_.1} parent=1 // pred_region
      %104 = dma.done [#allocation3], 1024
    $region49: #{_lambda_.1} parent=1 // pred_fallthru
      _
    // Predicated region
    $region50: #{_lambda_.1} parent=1 // pred_check
      _
    $region51: #{_lambda_.1} parent=1 // pred_check_branch
      %106 = sbr.rel (0) target = $region53
    $region52: #{_lambda_.1} parent=1 // pred_region
      %107 = dma.done [#allocation5], 1024
    $region53: #{_lambda_.1} parent=1 // pred_fallthru
      _
    // Predicated region
    $region54: #{_lambda_.1} parent=1 // pred_check
      _
    $region55: #{_lambda_.1} parent=1 // pred_check_branch
      %109 = sbr.rel (0) target = $region57
    $region56: #{_lambda_.1} parent=1 // pred_region
      %110 = dma.done [#allocation5], 1024
    $region57: #{_lambda_.1} parent=1 // pred_fallthru
      _
    // Predicated region
    $region58: #{_lambda_.1} parent=1 // pred_check
      _
    $region59: #{_lambda_.1} parent=1 // pred_check_branch
      %112 = sbr.rel (0) target = $region61
    $region60: #{_lambda_.1} parent=1 // pred_region
      %113 = dma.done [#allocation8], 1024
    $region61: #{_lambda_.1} parent=1 // pred_fallthru
      _
    // Predicated region
    $region62: #{_lambda_.1} parent=1 // pred_check
      _
    $region63: #{_lambda_.1} parent=1 // pred_check_branch
      %115 = sbr.rel (0) target = $region65
    $region64: #{_lambda_.1} parent=1 // pred_region
      %116 = dma.done [#allocation8], 1024
    $region65: #{_lambda_.1} parent=1 // pred_fallthru
      _
    // Predicated region
    $region66: #{_lambda_.1} parent=1 // pred_check
      _
    $region67: #{_lambda_.1} parent=1 // pred_check_branch
      %118 = sbr.rel (0) target = $region69
    $region68: #{_lambda_.1} parent=1 // pred_region
      %119 = dma.done [#allocation11], 1024
    $region69: #{_lambda_.1} parent=1 // pred_fallthru
      _
    %v121 = vld [vmem:[%s0] sm:$0xf]
    %v122 = vld [vmem:[%s0 + $0x4] sm:$0xf]
    %v123 = vld [vmem:[#allocation2] sm:$0xf]
    %v124 = vld [vmem:[#allocation2 + $0x4] sm:$0xf]
    %v125 = vld [vmem:[#allocation2 + $0x8] sm:$0xf]
    %v126 = vld [vmem:[#allocation2 + $0xc] sm:$0xf]
    %v127 = vld [vmem:[#allocation2 + $0x10] sm:$0xf]
    %v128 = vld [vmem:[#allocation2 + $0x14] sm:$0xf]
    %v129 = vld [vmem:[#allocation2 + $0x18] sm:$0xf]
    %v130 = vld [vmem:[#allocation2 + $0x1c] sm:$0xf]
    %v131 = vld [vmem:[#allocation2 + $0x20] sm:$0xf]
    %v132 = vld [vmem:[#allocation2 + $0x24] sm:$0xf]
    %v133 = vld [vmem:[#allocation2 + $0x28] sm:$0xf]
    %v134 = vld [vmem:[#allocation2 + $0x2c] sm:$0xf]
    %v135 = vld [vmem:[#allocation2 + $0x30] sm:$0xf]
    %v136 = vld [vmem:[#allocation2 + $0x34] sm:$0xf]
    %v137 = vld [vmem:[#allocation2 + $0x38] sm:$0xf]
    %v138 = vld [vmem:[#allocation2 + $0x3c] sm:$0xf]
    %v141 = vunpack.c.l.b16 %v121
    %v142 = vunpack.c.l.b16 %v122
    %v143 = vpack.c.b16 %v142, %v141
    %v161 = vunpack.c.l.b16 %v123
    %v162 = vunpack.c.l.b16 %v124
    %v163 = vunpack.c.l.b16 %v125
    %v164 = vunpack.c.l.b16 %v126
    %v165 = vunpack.c.l.b16 %v127
    %v166 = vunpack.c.l.b16 %v128
    %v167 = vunpack.c.l.b16 %v129
    %v168 = vunpack.c.l.b16 %v130
    %v169 = vunpack.c.l.b16 %v131
    %v170 = vunpack.c.l.b16 %v132
    %v171 = vunpack.c.l.b16 %v133
    %v172 = vunpack.c.l.b16 %v134
    %v173 = vunpack.c.l.b16 %v135
    %v174 = vunpack.c.l.b16 %v136
    %v175 = vunpack.c.l.b16 %v137
    %v176 = vunpack.c.l.b16 %v138
    %v177 = vpack.c.b16 %v162, %v161
    %v178 = vpack.c.b16 %v164, %v163
    %v179 = vpack.c.b16 %v166, %v165
    %v180 = vpack.c.b16 %v168, %v167
    %v181 = vpack.c.b16 %v170, %v169
    %v182 = vpack.c.b16 %v172, %v171
    %v183 = vpack.c.b16 %v174, %v173
    %v184 = vpack.c.b16 %v176, %v175
    %193 = vmatprep.subr.bf16.mxu0 0
    %194 = vmatpush1.bf16.msra.mxu0 %v184
    %195 = vmatprep.subr.bf16.mxu0 0
    %196 = vmatpush1.bf16.msra.mxu0 %v183
    %197 = vmatprep.subr.bf16.mxu0 0
    %198 = vmatpush1.bf16.msra.mxu0 %v182
    %199 = vmatprep.subr.bf16.mxu0 0
    %200 = vmatpush1.bf16.msra.mxu0 %v181
    %201 = vmatprep.subr.bf16.mxu0 0
    %202 = vmatpush1.bf16.msra.mxu0 %v180
    %203 = vmatprep.subr.bf16.mxu0 0
    %204 = vmatpush1.bf16.msra.mxu0 %v179
    %205 = vmatprep.subr.bf16.mxu0 0
    %206 = vmatpush1.bf16.msra.mxu0 %v178
    %207 = vmatprep.subr.bf16.mxu0 0
    %208 = vmatpush1.bf16.msra.mxu0 %v177
    %209 = vmatprep.subr.bf16.mxu0 0
    %210 = vmatpush2.bf16.msra.mxu0 0
    %211 = vmatprep.subr.bf16.mxu0 0
    %212 = vmatpush2.bf16.msra.mxu0 0
    %213 = vmatprep.subr.bf16.mxu0 0
    %214 = vmatpush2.bf16.msra.mxu0 0
    %215 = vmatprep.subr.bf16.mxu0 0
    %216 = vmatpush2.bf16.msra.mxu0 0
    %217 = vmatprep.subr.bf16.mxu0 0
    %218 = vmatpush2.bf16.msra.mxu0 0
    %219 = vmatprep.subr.bf16.mxu0 0
    %220 = vmatpush2.bf16.msra.mxu0 0
    %221 = vmatprep.subr.bf16.mxu0 0
    %222 = vmatpush2.bf16.msra.mxu0 0
    %223 = vmatprep.subr.bf16.mxu0 0
    %224 = vmatpush2.bf16.msra.mxu0 0
    %225 = vmatprep.mubr.bf16.mxu0 0
    %226 = vmatmul.mubr.bf16.gmra.mxu0 %v143
    %v227 = vpop.f32.mrf.mxu0
    %v228 = vadd.f32 0.0, %v227
    %v229 = vpop.f32.mrf.mxu0
    %v230 = vpop.f32.mrf.mxu0
    %v231 = vadd.f32 0.0, %v230
    %v232 = vpop.f32.mrf.mxu0
    %233 = vdwg.mxu0
    %v234 = vld [vmem:[%s2] sm:$0xff]
    %v235 = vlaneseq
    %v236 = vshrl.u32 %v235, 7
    %v237 = vsub.s32 0, %v236
    %v238 = vrot.slane %v234, %v237
    %v239 = vmul.f32 %v228, %v238
    %v240 = vmul.f32 %v231, %v238
    %v241 = vlaneseq
    %v242 = vshrl.u32 %v241, 7
    %v243 = vsub.s32 1, %v242
    %v244 = vrot.slane %v234, %v243
    %v245 = vadd.f32 %v239, %v244
    %v246 = vadd.f32 %v240, %v244
    %v247 = vmax.f32 %v245, 0.0
    %v248 = vmax.f32 %v246, 0.0
    %v249 = vpack.c.bf16 %v248, %v247
    %v250 = vld [vmem:[#allocation4] sm:$0xf]
    %v251 = vld [vmem:[#allocation4 + $0x4] sm:$0xf]
    %v252 = vld [vmem:[#allocation4 + $0x8] sm:$0xf]
    %v253 = vld [vmem:[#allocation4 + $0xc] sm:$0xf]
    %v254 = vld [vmem:[#allocation4 + $0x10] sm:$0xf]
    %v255 = vld [vmem:[#allocation4 + $0x14] sm:$0xf]
    %v256 = vld [vmem:[#allocation4 + $0x18] sm:$0xf]
    %v257 = vld [vmem:[#allocation4 + $0x1c] sm:$0xf]
    %v258 = vld [vmem:[#allocation4 + $0x20] sm:$0xf]
    %v259 = vld [vmem:[#allocation4 + $0x24] sm:$0xf]
    %v260 = vld [vmem:[#allocation4 + $0x28] sm:$0xf]
    %v261 = vld [vmem:[#allocation4 + $0x2c] sm:$0xf]
    %v262 = vld [vmem:[#allocation4 + $0x30] sm:$0xf]
    %v263 = vld [vmem:[#allocation4 + $0x34] sm:$0xf]
    %v264 = vld [vmem:[#allocation4 + $0x38] sm:$0xf]
    %v265 = vld [vmem:[#allocation4 + $0x3c] sm:$0xf]
    %v266 = vld [vmem:[#allocation6] sm:$0xf]
    %v267 = vld [vmem:[#allocation6 + $0x4] sm:$0xf]
    %v268 = vld [vmem:[#allocation6 + $0x8] sm:$0xf]
    %v269 = vld [vmem:[#allocation6 + $0xc] sm:$0xf]
    %v270 = vld [vmem:[#allocation6 + $0x10] sm:$0xf]
    %v271 = vld [vmem:[#allocation6 + $0x14] sm:$0xf]
    %v272 = vld [vmem:[#allocation6 + $0x18] sm:$0xf]
    %v273 = vld [vmem:[#allocation6 + $0x1c] sm:$0xf]
    %v274 = vld [vmem:[#allocation6 + $0x20] sm:$0xf]
    %v275 = vld [vmem:[#allocation6 + $0x24] sm:$0xf]
    %v276 = vld [vmem:[#allocation6 + $0x28] sm:$0xf]
    %v277 = vld [vmem:[#allocation6 + $0x2c] sm:$0xf]
    %v278 = vld [vmem:[#allocation6 + $0x30] sm:$0xf]
    %v279 = vld [vmem:[#allocation6 + $0x34] sm:$0xf]
    %v280 = vld [vmem:[#allocation6 + $0x38] sm:$0xf]
    %v281 = vld [vmem:[#allocation6 + $0x3c] sm:$0xf]
    %v298 = vunpack.c.l.b16 %v266
    %v299 = vunpack.c.l.b16 %v267
    %v300 = vunpack.c.l.b16 %v268
    %v301 = vunpack.c.l.b16 %v269
    %v302 = vunpack.c.l.b16 %v270
    %v303 = vunpack.c.l.b16 %v271
    %v304 = vunpack.c.l.b16 %v272
    %v305 = vunpack.c.l.b16 %v273
    %v306 = vunpack.c.l.b16 %v274
    %v307 = vunpack.c.l.b16 %v275
    %v308 = vunpack.c.l.b16 %v276
    %v309 = vunpack.c.l.b16 %v277
    %v310 = vunpack.c.l.b16 %v278
    %v311 = vunpack.c.l.b16 %v279
    %v312 = vunpack.c.l.b16 %v280
    %v313 = vunpack.c.l.b16 %v281
    %v314 = vpack.c.b16 %v299, %v298
    %v315 = vpack.c.b16 %v301, %v300
    %v316 = vpack.c.b16 %v303, %v302
    %v317 = vpack.c.b16 %v305, %v304
    %v318 = vpack.c.b16 %v307, %v306
    %v319 = vpack.c.b16 %v309, %v308
    %v320 = vpack.c.b16 %v311, %v310
    %v321 = vpack.c.b16 %v313, %v312
    %330 = vmatprep.subr.bf16.mxu0 0
    %331 = vmatpush1.bf16.msra.mxu0 %v321
    %332 = vmatprep.subr.bf16.mxu0 0
    %333 = vmatpush1.bf16.msra.mxu0 %v320
    %334 = vmatprep.subr.bf16.mxu0 0
    %335 = vmatpush1.bf16.msra.mxu0 %v319
    %336 = vmatprep.subr.bf16.mxu0 0
    %337 = vmatpush1.bf16.msra.mxu0 %v318
    %338 = vmatprep.subr.bf16.mxu0 0
    %339 = vmatpush1.bf16.msra.mxu0 %v317
    %340 = vmatprep.subr.bf16.mxu0 0
    %341 = vmatpush1.bf16.msra.mxu0 %v316
    %342 = vmatprep.subr.bf16.mxu0 0
    %343 = vmatpush1.bf16.msra.mxu0 %v315
    %344 = vmatprep.subr.bf16.mxu0 0
    %345 = vmatpush1.bf16.msra.mxu0 %v314
    %346 = vmatprep.subr.bf16.mxu0 0
    %347 = vmatpush2.bf16.msra.mxu0 0
    %348 = vmatprep.subr.bf16.mxu0 0
    %349 = vmatpush2.bf16.msra.mxu0 0
    %350 = vmatprep.subr.bf16.mxu0 0
    %351 = vmatpush2.bf16.msra.mxu0 0
    %352 = vmatprep.subr.bf16.mxu0 0
    %353 = vmatpush2.bf16.msra.mxu0 0
    %354 = vmatprep.subr.bf16.mxu0 0
    %355 = vmatpush2.bf16.msra.mxu0 0
    %356 = vmatprep.subr.bf16.mxu0 0
    %357 = vmatpush2.bf16.msra.mxu0 0
    %358 = vmatprep.subr.bf16.mxu0 0
    %359 = vmatpush2.bf16.msra.mxu0 0
    %360 = vmatprep.subr.bf16.mxu0 0
    %361 = vmatpush2.bf16.msra.mxu0 0
    %362 = vmatprep.mubr.bf16.mxu0 0
    %363 = vmatmul.mubr.bf16.gmra.mxu0 %v249
    %v364 = vpop.f32.mrf.mxu0
    %v365 = vadd.f32 0.0, %v364
    %v366 = vpop.f32.mrf.mxu0
    %v367 = vpop.f32.mrf.mxu0
    %v368 = vadd.f32 0.0, %v367
    %v369 = vpop.f32.mrf.mxu0
    %370 = vdwg.mxu0
    %v371 = vld [vmem:[%s5] sm:$0xff]
    %v372 = vlaneseq
    %v373 = vshrl.u32 %v372, 7
    %v374 = vsub.s32 0, %v373
    %v375 = vrot.slane %v371, %v374
    %v376 = vmul.f32 %v365, %v375
    %v377 = vmul.f32 %v368, %v375
    %v378 = vlaneseq
    %v379 = vshrl.u32 %v378, 7
    %v380 = vsub.s32 1, %v379
    %v381 = vrot.slane %v371, %v380
    %v382 = vadd.f32 %v376, %v381
    %v383 = vadd.f32 %v377, %v381
    %v384 = vmax.f32 %v382, 0.0
    %v385 = vmax.f32 %v383, 0.0
    %v386 = vpack.c.bf16 %v385, %v384
    %v387 = vld [vmem:[#allocation7] sm:$0xf]
    %v388 = vld [vmem:[#allocation7 + $0x4] sm:$0xf]
    %v389 = vld [vmem:[#allocation7 + $0x8] sm:$0xf]
    %v390 = vld [vmem:[#allocation7 + $0xc] sm:$0xf]
    %v391 = vld [vmem:[#allocation7 + $0x10] sm:$0xf]
    %v392 = vld [vmem:[#allocation7 + $0x14] sm:$0xf]
    %v393 = vld [vmem:[#allocation7 + $0x18] sm:$0xf]
    %v394 = vld [vmem:[#allocation7 + $0x1c] sm:$0xf]
    %v395 = vld [vmem:[#allocation7 + $0x20] sm:$0xf]
    %v396 = vld [vmem:[#allocation7 + $0x24] sm:$0xf]
    %v397 = vld [vmem:[#allocation7 + $0x28] sm:$0xf]
    %v398 = vld [vmem:[#allocation7 + $0x2c] sm:$0xf]
    %v399 = vld [vmem:[#allocation7 + $0x30] sm:$0xf]
    %v400 = vld [vmem:[#allocation7 + $0x34] sm:$0xf]
    %v401 = vld [vmem:[#allocation7 + $0x38] sm:$0xf]
    %v402 = vld [vmem:[#allocation7 + $0x3c] sm:$0xf]
    %v419 = vunpack.c.l.b16 %v387
    %v420 = vunpack.c.l.b16 %v388
    %v421 = vunpack.c.l.b16 %v389
    %v422 = vunpack.c.l.b16 %v390
    %v423 = vunpack.c.l.b16 %v391
    %v424 = vunpack.c.l.b16 %v392
    %v425 = vunpack.c.l.b16 %v393
    %v426 = vunpack.c.l.b16 %v394
    %v427 = vunpack.c.l.b16 %v395
    %v428 = vunpack.c.l.b16 %v396
    %v429 = vunpack.c.l.b16 %v397
    %v430 = vunpack.c.l.b16 %v398
    %v431 = vunpack.c.l.b16 %v399
    %v432 = vunpack.c.l.b16 %v400
    %v433 = vunpack.c.l.b16 %v401
    %v434 = vunpack.c.l.b16 %v402
    %v435 = vpack.c.b16 %v420, %v419
    %v436 = vpack.c.b16 %v422, %v421
    %v437 = vpack.c.b16 %v424, %v423
    %v438 = vpack.c.b16 %v426, %v425
    %v439 = vpack.c.b16 %v428, %v427
    %v440 = vpack.c.b16 %v430, %v429
    %v441 = vpack.c.b16 %v432, %v431
    %v442 = vpack.c.b16 %v434, %v433
    %451 = vmatprep.subr.bf16.mxu0 0
    %452 = vmatpush1.bf16.msra.mxu0 %v442
    %453 = vmatprep.subr.bf16.mxu0 0
    %454 = vmatpush1.bf16.msra.mxu0 %v441
    %455 = vmatprep.subr.bf16.mxu0 0
    %456 = vmatpush1.bf16.msra.mxu0 %v440
    %457 = vmatprep.subr.bf16.mxu0 0
    %458 = vmatpush1.bf16.msra.mxu0 %v439
    %459 = vmatprep.subr.bf16.mxu0 0
    %460 = vmatpush1.bf16.msra.mxu0 %v438
    %461 = vmatprep.subr.bf16.mxu0 0
    %462 = vmatpush1.bf16.msra.mxu0 %v437
    %463 = vmatprep.subr.bf16.mxu0 0
    %464 = vmatpush1.bf16.msra.mxu0 %v436
    %465 = vmatprep.subr.bf16.mxu0 0
    %466 = vmatpush1.bf16.msra.mxu0 %v435
    %467 = vmatprep.subr.bf16.mxu0 0
    %468 = vmatpush2.bf16.msra.mxu0 0
    %469 = vmatprep.subr.bf16.mxu0 0
    %470 = vmatpush2.bf16.msra.mxu0 0
    %471 = vmatprep.subr.bf16.mxu0 0
    %472 = vmatpush2.bf16.msra.mxu0 0
    %473 = vmatprep.subr.bf16.mxu0 0
    %474 = vmatpush2.bf16.msra.mxu0 0
    %475 = vmatprep.subr.bf16.mxu0 0
    %476 = vmatpush2.bf16.msra.mxu0 0
    %477 = vmatprep.subr.bf16.mxu0 0
    %478 = vmatpush2.bf16.msra.mxu0 0
    %479 = vmatprep.subr.bf16.mxu0 0
    %480 = vmatpush2.bf16.msra.mxu0 0
    %481 = vmatprep.subr.bf16.mxu0 0
    %482 = vmatpush2.bf16.msra.mxu0 0
    %483 = vmatprep.mubr.bf16.mxu0 0
    %484 = vmatmul.mubr.bf16.gmra.mxu0 %v386
    %v485 = vpop.f32.mrf.mxu0
    %v486 = vadd.f32 0.0, %v485
    %v487 = vpop.f32.mrf.mxu0
    %v488 = vpop.f32.mrf.mxu0
    %v489 = vadd.f32 0.0, %v488
    %v490 = vpop.f32.mrf.mxu0
    %491 = vdwg.mxu0
    %v508 = vunpack.c.l.b16 %v250
    %v509 = vunpack.c.l.b16 %v251
    %v510 = vunpack.c.l.b16 %v252
    %v511 = vunpack.c.l.b16 %v253
    %v512 = vunpack.c.l.b16 %v254
    %v513 = vunpack.c.l.b16 %v255
    %v514 = vunpack.c.l.b16 %v256
    %v515 = vunpack.c.l.b16 %v257
    %v516 = vunpack.c.l.b16 %v258
    %v517 = vunpack.c.l.b16 %v259
    %v518 = vunpack.c.l.b16 %v260
    %v519 = vunpack.c.l.b16 %v261
    %v520 = vunpack.c.l.b16 %v262
    %v521 = vunpack.c.l.b16 %v263
    %v522 = vunpack.c.l.b16 %v264
    %v523 = vunpack.c.l.b16 %v265
    %v524 = vpack.c.b16 %v509, %v508
    %v525 = vpack.c.b16 %v511, %v510
    %v526 = vpack.c.b16 %v513, %v512
    %v527 = vpack.c.b16 %v515, %v514
    %v528 = vpack.c.b16 %v517, %v516
    %v529 = vpack.c.b16 %v519, %v518
    %v530 = vpack.c.b16 %v521, %v520
    %v531 = vpack.c.b16 %v523, %v522
    %540 = vmatprep.subr.bf16.mxu0 0
    %541 = vmatpush1.bf16.msra.mxu0 %v531
    %542 = vmatprep.subr.bf16.mxu0 0
    %543 = vmatpush1.bf16.msra.mxu0 %v530
    %544 = vmatprep.subr.bf16.mxu0 0
    %545 = vmatpush1.bf16.msra.mxu0 %v529
    %546 = vmatprep.subr.bf16.mxu0 0
    %547 = vmatpush1.bf16.msra.mxu0 %v528
    %548 = vmatprep.subr.bf16.mxu0 0
    %549 = vmatpush1.bf16.msra.mxu0 %v527
    %550 = vmatprep.subr.bf16.mxu0 0
    %551 = vmatpush1.bf16.msra.mxu0 %v526
    %552 = vmatprep.subr.bf16.mxu0 0
    %553 = vmatpush1.bf16.msra.mxu0 %v525
    %554 = vmatprep.subr.bf16.mxu0 0
    %555 = vmatpush1.bf16.msra.mxu0 %v524
    %556 = vmatprep.subr.bf16.mxu0 0
    %557 = vmatpush2.bf16.msra.mxu0 0
    %558 = vmatprep.subr.bf16.mxu0 0
    %559 = vmatpush2.bf16.msra.mxu0 0
    %560 = vmatprep.subr.bf16.mxu0 0
    %561 = vmatpush2.bf16.msra.mxu0 0
    %562 = vmatprep.subr.bf16.mxu0 0
    %563 = vmatpush2.bf16.msra.mxu0 0
    %564 = vmatprep.subr.bf16.mxu0 0
    %565 = vmatpush2.bf16.msra.mxu0 0
    %566 = vmatprep.subr.bf16.mxu0 0
    %567 = vmatpush2.bf16.msra.mxu0 0
    %568 = vmatprep.subr.bf16.mxu0 0
    %569 = vmatpush2.bf16.msra.mxu0 0
    %570 = vmatprep.subr.bf16.mxu0 0
    %571 = vmatpush2.bf16.msra.mxu0 0
    %572 = vmatprep.mubr.bf16.mxu0 0
    %573 = vmatmul.mubr.bf16.gmra.mxu0 %v249
    %v574 = vpop.f32.mrf.mxu0
    %v575 = vadd.f32 %v486, %v574
    %v576 = vpop.f32.mrf.mxu0
    %v577 = vpop.f32.mrf.mxu0
    %v578 = vadd.f32 %v489, %v577
    %v579 = vpop.f32.mrf.mxu0
    %580 = vdwg.mxu0
    %v581 = vld [vmem:[#allocation9] sm:$0xf]
    %v582 = vld [vmem:[#allocation9 + $0x4] sm:$0xf]
    %v583 = vld [vmem:[#allocation9 + $0x8] sm:$0xf]
    %v584 = vld [vmem:[#allocation9 + $0xc] sm:$0xf]
    %v585 = vld [vmem:[#allocation9 + $0x10] sm:$0xf]
    %v586 = vld [vmem:[#allocation9 + $0x14] sm:$0xf]
    %v587 = vld [vmem:[#allocation9 + $0x18] sm:$0xf]
    %v588 = vld [vmem:[#allocation9 + $0x1c] sm:$0xf]
    %v589 = vld [vmem:[#allocation9 + $0x20] sm:$0xf]
    %v590 = vld [vmem:[#allocation9 + $0x24] sm:$0xf]
    %v591 = vld [vmem:[#allocation9 + $0x28] sm:$0xf]
    %v592 = vld [vmem:[#allocation9 + $0x2c] sm:$0xf]
    %v593 = vld [vmem:[#allocation9 + $0x30] sm:$0xf]
    %v594 = vld [vmem:[#allocation9 + $0x34] sm:$0xf]
    %v595 = vld [vmem:[#allocation9 + $0x38] sm:$0xf]
    %v596 = vld [vmem:[#allocation9 + $0x3c] sm:$0xf]
    %v613 = vunpack.c.l.b16 %v581
    %v614 = vunpack.c.l.b16 %v582
    %v615 = vunpack.c.l.b16 %v583
    %v616 = vunpack.c.l.b16 %v584
    %v617 = vunpack.c.l.b16 %v585
    %v618 = vunpack.c.l.b16 %v586
    %v619 = vunpack.c.l.b16 %v587
    %v620 = vunpack.c.l.b16 %v588
    %v621 = vunpack.c.l.b16 %v589
    %v622 = vunpack.c.l.b16 %v590
    %v623 = vunpack.c.l.b16 %v591
    %v624 = vunpack.c.l.b16 %v592
    %v625 = vunpack.c.l.b16 %v593
    %v626 = vunpack.c.l.b16 %v594
    %v627 = vunpack.c.l.b16 %v595
    %v628 = vunpack.c.l.b16 %v596
    %v629 = vpack.c.b16 %v614, %v613
    %v630 = vpack.c.b16 %v616, %v615
    %v631 = vpack.c.b16 %v618, %v617
    %v632 = vpack.c.b16 %v620, %v619
    %v633 = vpack.c.b16 %v622, %v621
    %v634 = vpack.c.b16 %v624, %v623
    %v635 = vpack.c.b16 %v626, %v625
    %v636 = vpack.c.b16 %v628, %v627
    %645 = vmatprep.subr.bf16.mxu0 0
    %646 = vmatpush1.bf16.msra.mxu0 %v636
    %647 = vmatprep.subr.bf16.mxu0 0
    %648 = vmatpush1.bf16.msra.mxu0 %v635
    %649 = vmatprep.subr.bf16.mxu0 0
    %650 = vmatpush1.bf16.msra.mxu0 %v634
    %651 = vmatprep.subr.bf16.mxu0 0
    %652 = vmatpush1.bf16.msra.mxu0 %v633
    %653 = vmatprep.subr.bf16.mxu0 0
    %654 = vmatpush1.bf16.msra.mxu0 %v632
    %655 = vmatprep.subr.bf16.mxu0 0
    %656 = vmatpush1.bf16.msra.mxu0 %v631
    %657 = vmatprep.subr.bf16.mxu0 0
    %658 = vmatpush1.bf16.msra.mxu0 %v630
    %659 = vmatprep.subr.bf16.mxu0 0
    %660 = vmatpush1.bf16.msra.mxu0 %v629
    %661 = vmatprep.subr.bf16.mxu0 0
    %662 = vmatpush2.bf16.msra.mxu0 0
    %663 = vmatprep.subr.bf16.mxu0 0
    %664 = vmatpush2.bf16.msra.mxu0 0
    %665 = vmatprep.subr.bf16.mxu0 0
    %666 = vmatpush2.bf16.msra.mxu0 0
    %667 = vmatprep.subr.bf16.mxu0 0
    %668 = vmatpush2.bf16.msra.mxu0 0
    %669 = vmatprep.subr.bf16.mxu0 0
    %670 = vmatpush2.bf16.msra.mxu0 0
    %671 = vmatprep.subr.bf16.mxu0 0
    %672 = vmatpush2.bf16.msra.mxu0 0
    %673 = vmatprep.subr.bf16.mxu0 0
    %674 = vmatpush2.bf16.msra.mxu0 0
    %675 = vmatprep.subr.bf16.mxu0 0
    %676 = vmatpush2.bf16.msra.mxu0 0
    %677 = vmatprep.mubr.bf16.mxu0 0
    %678 = vmatmul.mubr.bf16.gmra.mxu0 %v386
    %v679 = vpop.f32.mrf.mxu0
    %v680 = vadd.f32 0.0, %v679
    %v681 = vpop.f32.mrf.mxu0
    %v682 = vpop.f32.mrf.mxu0
    %v683 = vadd.f32 0.0, %v682
    %v684 = vpop.f32.mrf.mxu0
    %685 = vdwg.mxu0
    %v686 = vld [vmem:[%s8] sm:$0xff]
    %v687 = vlaneseq
    %v688 = vshrl.u32 %v687, 7
    %v689 = vsub.s32 0, %v688
    %v690 = vrot.slane %v686, %v689
    %v691 = vmul.f32 %v680, %v690
    %v692 = vmul.f32 %v683, %v690
    %v693 = vlaneseq
    %v694 = vshrl.u32 %v693, 7
    %v695 = vsub.s32 1, %v694
    %v696 = vrot.slane %v686, %v695
    %v697 = vadd.f32 %v691, %v696
    %v698 = vadd.f32 %v692, %v696
    %v699 = vmax.f32 %v697, 0.0
    %v700 = vmax.f32 %v698, 0.0
    %v701 = vpack.c.bf16 %v700, %v699
    %v702 = vld [vmem:[#allocation10] sm:$0xf]
    %v703 = vld [vmem:[#allocation10 + $0x4] sm:$0xf]
    %v704 = vld [vmem:[#allocation10 + $0x8] sm:$0xf]
    %v705 = vld [vmem:[#allocation10 + $0xc] sm:$0xf]
    %v706 = vld [vmem:[#allocation10 + $0x10] sm:$0xf]
    %v707 = vld [vmem:[#allocation10 + $0x14] sm:$0xf]
    %v708 = vld [vmem:[#allocation10 + $0x18] sm:$0xf]
    %v709 = vld [vmem:[#allocation10 + $0x1c] sm:$0xf]
    %v710 = vld [vmem:[#allocation10 + $0x20] sm:$0xf]
    %v711 = vld [vmem:[#allocation10 + $0x24] sm:$0xf]
    %v712 = vld [vmem:[#allocation10 + $0x28] sm:$0xf]
    %v713 = vld [vmem:[#allocation10 + $0x2c] sm:$0xf]
    %v714 = vld [vmem:[#allocation10 + $0x30] sm:$0xf]
    %v715 = vld [vmem:[#allocation10 + $0x34] sm:$0xf]
    %v716 = vld [vmem:[#allocation10 + $0x38] sm:$0xf]
    %v717 = vld [vmem:[#allocation10 + $0x3c] sm:$0xf]
    %v734 = vunpack.c.l.b16 %v702
    %v735 = vunpack.c.l.b16 %v703
    %v736 = vunpack.c.l.b16 %v704
    %v737 = vunpack.c.l.b16 %v705
    %v738 = vunpack.c.l.b16 %v706
    %v739 = vunpack.c.l.b16 %v707
    %v740 = vunpack.c.l.b16 %v708
    %v741 = vunpack.c.l.b16 %v709
    %v742 = vunpack.c.l.b16 %v710
    %v743 = vunpack.c.l.b16 %v711
    %v744 = vunpack.c.l.b16 %v712
    %v745 = vunpack.c.l.b16 %v713
    %v746 = vunpack.c.l.b16 %v714
    %v747 = vunpack.c.l.b16 %v715
    %v748 = vunpack.c.l.b16 %v716
    %v749 = vunpack.c.l.b16 %v717
    %v750 = vpack.c.b16 %v735, %v734
    %v751 = vpack.c.b16 %v737, %v736
    %v752 = vpack.c.b16 %v739, %v738
    %v753 = vpack.c.b16 %v741, %v740
    %v754 = vpack.c.b16 %v743, %v742
    %v755 = vpack.c.b16 %v745, %v744
    %v756 = vpack.c.b16 %v747, %v746
    %v757 = vpack.c.b16 %v749, %v748
    %766 = vmatprep.subr.bf16.mxu0 0
    %767 = vmatpush1.bf16.msra.mxu0 %v757
    %768 = vmatprep.subr.bf16.mxu0 0
    %769 = vmatpush1.bf16.msra.mxu0 %v756
    %770 = vmatprep.subr.bf16.mxu0 0
    %771 = vmatpush1.bf16.msra.mxu0 %v755
    %772 = vmatprep.subr.bf16.mxu0 0
    %773 = vmatpush1.bf16.msra.mxu0 %v754
    %774 = vmatprep.subr.bf16.mxu0 0
    %775 = vmatpush1.bf16.msra.mxu0 %v753
    %776 = vmatprep.subr.bf16.mxu0 0
    %777 = vmatpush1.bf16.msra.mxu0 %v752
    %778 = vmatprep.subr.bf16.mxu0 0
    %779 = vmatpush1.bf16.msra.mxu0 %v751
    %780 = vmatprep.subr.bf16.mxu0 0
    %781 = vmatpush1.bf16.msra.mxu0 %v750
    %782 = vmatprep.subr.bf16.mxu0 0
    %783 = vmatpush2.bf16.msra.mxu0 0
    %784 = vmatprep.subr.bf16.mxu0 0
    %785 = vmatpush2.bf16.msra.mxu0 0
    %786 = vmatprep.subr.bf16.mxu0 0
    %787 = vmatpush2.bf16.msra.mxu0 0
    %788 = vmatprep.subr.bf16.mxu0 0
    %789 = vmatpush2.bf16.msra.mxu0 0
    %790 = vmatprep.subr.bf16.mxu0 0
    %791 = vmatpush2.bf16.msra.mxu0 0
    %792 = vmatprep.subr.bf16.mxu0 0
    %793 = vmatpush2.bf16.msra.mxu0 0
    %794 = vmatprep.subr.bf16.mxu0 0
    %795 = vmatpush2.bf16.msra.mxu0 0
    %796 = vmatprep.subr.bf16.mxu0 0
    %797 = vmatpush2.bf16.msra.mxu0 0
    %798 = vmatprep.mubr.bf16.mxu0 0
    %799 = vmatmul.mubr.bf16.gmra.mxu0 %v701
    %v800 = vpop.f32.mrf.mxu0
    %v801 = vadd.f32 0.0, %v800
    %v802 = vpop.f32.mrf.mxu0
    %v803 = vpop.f32.mrf.mxu0
    %v804 = vadd.f32 0.0, %v803
    %v805 = vpop.f32.mrf.mxu0
    %806 = vdwg.mxu0
    %v807 = vadd.f32 %v575, %v801
    %v808 = vadd.f32 %v578, %v804
    %v809 = vld [vmem:[%s10] sm:$0x1]
    %v811 = vlaneseq
    %v812 = vshrl.u32 %v811, 7
    %v813 = vsub.s32 0, %v812
    %v814 = vrot.slane %v809, %v813
    %v816 = vadd.f32 %v807, %v814
    %v817 = vadd.f32 %v808, %v814
    %818 = vst [vmem:[%s11] sm:$0xff] %v816
    %819 = vst [vmem:[%s11 + $0x8] sm:$0xff] %v817
    // Predicated region
    $region70: #{_lambda_.1} parent=1 // pred_check
      _
    $region71: #{_lambda_.1} parent=1 // pred_check_branch
      %821 = sbr.rel (0) target = $region73
    $region72: #{_lambda_.1} parent=1 // pred_region
      _
    $region73: #{_lambda_.1} parent=1 // pred_fallthru
      _
    // Predicated region
    $region74: #{_lambda_.1} parent=1 // pred_check
      _
    $region75: #{_lambda_.1} parent=1 // pred_check_branch
      %823 = sbr.rel (0) target = $region77
    $region76: #{_lambda_.1} parent=1 // pred_region
      _
    $region77: #{_lambda_.1} parent=1 // pred_fallthru
      _
    %824 = vsyncpa [#allocation3], 1
    %825 = vsyncpa [#allocation5], 1
    %826 = vsyncpa [#allocation8], 1
    %827 = vsyncpa [#allocation11], 1

</llo_original>
